<compile_context>
chip_gen: v6e
topology: v6e:2x2x1
jax: 0.10.0
libtpu: 0.0.40
codegen_flags: <defaults>
</compile_context>

<pallas_src>
import functools

import jax
import jax.numpy as jnp
from jax import lax
from jax.experimental import pallas as pl
from jax.experimental.pallas import tpu as pltpu


def _largest_divisor_leq(n, cap):
    cap = max(1, min(n, cap))
    for d in range(cap, 0, -1):
        if n % d == 0:
            return d
    return 1


def _default_block_bytes():
    """Generation-aware logits-block byte target."""
    try:
        info = pltpu.get_tpu_info()
        vmem = getattr(info, "vmem_capacity_bytes", 0) or 0
        if vmem >= (96 << 20):       # v5e / v6e: 128 MiB physical VMEM
            return 4 << 20
    except Exception:
        pass
    return 2 << 20                   # v7x (64 MiB physical) and safe fallback


def _focal_loss_kernel(x_ref, t_ref, o_ref, *, gamma, alpha, hw, tile_hw, sub, bn):
    """Processes one (bn, C, tile_hw) logits block.

    The block is consumed in (C, sub)-wide lane chunks by an inner fori_loop so
    that elementwise temporaries stay a few vregs even when the DMA block is
    multiple MiB.  Per-lane losses accumulate into a (1, sub) vector that is
    written out as a lane-dense partial; the tiny final reduce is in the wrapper.
    """
    j = pl.program_id(1)
    c = x_ref.shape[1]
    n_sub = tile_hw // sub
    n_chunks = bn * n_sub
    ragged = (hw % tile_hw) != 0          # trace-time: only last HW block is short
    limit = hw - j * tile_hw              # valid columns in this block (if ragged)

    def chunk(i, acc):
        # Flat chunk index -> (sample-in-block, lane-chunk).
        if bn == 1:
            b, s = 0, i
        elif n_sub == 1:
            b, s = i, 0
        else:
            b, s = i // n_sub, i % n_sub

        if n_sub == 1:
            xc = x_ref[b]                                   # (C, tile_hw)
            tc = t_ref[b]                                   # (1, tile_hw)
        else:
            start = pl.multiple_of(s * sub, sub)            # 128-aligned
            xc = x_ref[b, :, pl.ds(start, sub)]
            tc = t_ref[b, :, pl.ds(start, sub)]

        x = xc.astype(jnp.float32)                          # (C, sub)
        t = tc.astype(jnp.int32)                            # (1, sub) widen int8/16

        # log-softmax pieces over the class (sublane) axis.
        mx = jnp.max(x, axis=0, keepdims=True)              # (1, sub)
        z = x - mx
        e = jnp.exp(z)                                      # only per-class EUP op
        ssum = jnp.sum(e, axis=0, keepdims=True)            # (1, sub)

        # gather(1, target) via one-hot compare, reusing z and e.
        cls = lax.broadcasted_iota(jnp.int32, x.shape, 0)
        hit = cls == t                                      # (C, sub)
        zt = jnp.sum(jnp.where(hit, z, 0.0), axis=0, keepdims=True)
        et = jnp.sum(jnp.where(hit, e, 0.0), axis=0, keepdims=True)   # = exp(zt)

        logpt = zt - jnp.log(ssum)
        # pt = softmax(x)[target]: single-pass EUP reciprocal + 2 Newton steps
        # (~f32 exact) instead of a second exp -> shorter EUP stream.
        r = pl.reciprocal(ssum, approx=True)
        r = r * (2.0 - ssum * r)
        r = r * (2.0 - ssum * r)
        pt = et * r

        if alpha is not None:
            # alpha.gather(0, target): alpha is a trace-time constant tuple, so
            # this is an unrolled select-accumulate (no broadcast-mul, no extra
            # XLU reduce, no alpha operand stream).
            at = jnp.zeros_like(logpt)
            for k, ak in enumerate(alpha):
                at = jnp.where(t == k, jnp.float32(ak), at)
            logpt = logpt * at

        g = gamma
        if g == 0.0:
            loss = -logpt
        else:
            omp = jnp.maximum(1.0 - pt, 0.0)     # clamp: pt can exceed 1 by an ulp
            if float(g).is_integer() and 1.0 <= g <= 8.0:
                focal = omp                       # integer power by VALU multiplies
                for _ in range(int(g) - 1):       # (keeps the single EUP slot free)
                    focal = focal * omp
            else:
                focal = omp ** jnp.float32(g)
            loss = -(focal * logpt)               # (1, sub)

        if ragged:
            # Only compiled in when HW doesn't divide the tile: zero garbage
            # columns of the short last block (NaN-safe).
            col = lax.broadcasted_iota(jnp.int32, loss.shape, 1) + s * sub
            loss = jnp.where(col < limit, loss, 0.0)

        return acc + loss

    zero = jnp.zeros((1, sub), jnp.float32)
    if n_chunks == 1:
        acc = chunk(0, zero)
    else:
        acc = lax.fori_loop(0, n_chunks, chunk, zero, unroll=n_chunks <= 8)

    # Lane-dense partial (no in-kernel cross-lane reduce; unmasked vst when sub
    # is a multiple of 128).  Wrapper does the tiny final sum.
    o_ref[...] = acc.reshape(1, 1, 1, sub)


def focal_loss(logits, target, gamma=0.0, alpha=None, size_average=True,
               block_bytes=None, sub_lanes=512):
    """Matches FocalLoss(gamma, alpha, size_average).forward(logits, target)."""
    # ---- module-equivalent preprocessing --------------------------------
    if logits.ndim > 2:
        n, c = logits.shape[0], logits.shape[1]
        x = logits.reshape(n, c, -1)              # free reshape: NCHW stays contiguous
    else:
        # 2-D (M, C) path: classes must land on sublanes -> one transpose
        # (one extra HBM pass; the NCHW path above has none).
        c = logits.shape[1]
        x = jnp.transpose(logits, (1, 0))[None]   # (1, C, M)
        n = 1
    hw = x.shape[2]

    # Targets: keep narrow int dtypes as-is (widened in-kernel).
    t = target.reshape(n, 1, hw)
    if not jnp.issubdtype(t.dtype, jnp.integer) or t.dtype.itemsize > 4:
        t = t.astype(jnp.int32)

    # alpha handling mirrors __init__: scalar -> [a, 1-a]; baked as constants.
    if isinstance(alpha, (float, int)) and not isinstance(alpha, bool):
        alpha = [float(alpha), 1.0 - float(alpha)]
    if alpha is not None:
        alpha = tuple(float(a) for a in alpha)
        assert len(alpha) == c, "alpha length must equal number of classes"

    # ---- block / grid selection ------------------------------------------
    if block_bytes is None:
        block_bytes = _default_block_bytes()
    itemsize = x.dtype.itemsize
    # HW lanes per block so one logits block hits the byte target (measured
    # tile sweep: >=1 MiB blocks ~85%+ of HBM roofline vs 25-30% for tiny ones).
    lanes_budget = max(128, (block_bytes // (c * itemsize)) // 128 * 128)
    sample_lanes128 = -(-hw // 128) * 128          # padded per-sample lane footprint

    if hw > lanes_budget:
        # Big images: one sample per block, 128-aligned HW tiles of ~block_bytes.
        bn, tile_hw = 1, lanes_budget
    elif hw >= 1024 and hw % 128 != 0:
        # Large non-128-aligned HW: tile at a 128 multiple (ragged tail block)
        # so the in-kernel chunk loop stays narrow.
        bn, tile_hw = 1, 128 * (hw // 128)
    else:
        # Small / aligned samples: whole-sample tiles, batch samples per block
        # to reach the byte target (small-HW inputs are otherwise pure
        # per-grid-step overhead).
        tile_hw = hw
        bn = _largest_divisor_leq(n, max(1, lanes_budget // sample_lanes128))

    num_j = pl.cdiv(hw, tile_hw)
    gi = n // bn
    # Keep >=2 grid steps when possible (v7x has 2 TensorCores; a 1-step grid
    # serializes onto one of them).
    if gi * num_j == 1:
        if n >= 2:
            bn = _largest_divisor_leq(n, max(1, n // 2))
            gi = n // bn
        elif hw > 128:
            tile_hw = 128 * pl.cdiv(pl.cdiv(hw, 2), 128)
            num_j = pl.cdiv(hw, tile_hw)

    # In-kernel chunk width: <=sub_lanes, 128-aligned, divides tile_hw (keeps
    # temporaries a few vregs so multi-MiB blocks don't blow up VMEM/vregs).
    sub = tile_hw
    for cand in (sub_lanes, 512, 256, 128):
        if cand % 128 == 0 and cand <= tile_hw and tile_hw % cand == 0:
            sub = cand
            break

    # Explicit VMEM limit: double-buffered IO blocks + headroom (covers v5e's
    # 16 MiB default scoped limit; stays well under v7x's 64 MiB physical).
    pad = lambda v, m: -(-v // m) * m
    lane_pad = pad(tile_hw, 128)
    x_blk = bn * pad(c, 8) * lane_pad * itemsize
    t_blk = bn * 32 * lane_pad
    o_blk = pad(sub, 128) * 8 * 4
    need = 2 * (x_blk + t_blk + o_blk)
    vmem_limit = int(min(max(need + (8 << 20), 16 << 20), 30 << 20))

    kernel = functools.partial(_focal_loss_kernel, gamma=float(gamma),
                               alpha=alpha, hw=hw, tile_hw=tile_hw,
                               sub=sub, bn=bn)

    partials = pl.pallas_call(
        kernel,
        out_shape=jax.ShapeDtypeStruct((gi, num_j, 1, sub), jnp.float32),
        grid_spec=pltpu.PrefetchScalarGridSpec(
            num_scalar_prefetch=0,
            grid=(gi, num_j),
            in_specs=[
                pl.BlockSpec((bn, c, tile_hw), lambda i, j: (i, 0, j)),   # logits
                pl.BlockSpec((bn, 1, tile_hw), lambda i, j: (i, 0, j)),   # targets
            ],
            out_specs=pl.BlockSpec((1, 1, 1, sub), lambda i, j: (i, j, 0, 0)),
        ),
        compiler_params=pltpu.CompilerParams(
            dimension_semantics=("parallel", "parallel"),
            vmem_limit_bytes=vmem_limit),
    )(x, t)

    total = jnp.sum(partials)
    if size_average:
        total = total / jnp.float32(n * hw)
    return total


def focal_loss_ref(logits, target, gamma, alpha, size_average):
    """Pure-JAX reference reproducing the PyTorch forward."""
    if logits.ndim > 2:
        n, c = logits.shape[0], logits.shape[1]
        x = jnp.transpose(logits.reshape(n, c, -1), (0, 2, 1)).reshape(-1, c)
    else:
        x = logits
    t = target.reshape(-1).astype(jnp.int32)
    logp = jax.nn.log_softmax(x.astype(jnp.float32), axis=-1)
    logpt = jnp.take_along_axis(logp, t[:, None], axis=1)[:, 0]
    pt = jnp.exp(logpt)
    if alpha is not None:
        if isinstance(alpha, (float, int)):
            alpha = [float(alpha), 1.0 - float(alpha)]
        at = jnp.asarray(alpha, jnp.float32)[t]
        logpt = logpt * at
    # clamp mirrors the kernel's NaN guard (pt can round to 1 + ulp)
    loss = -1.0 * jnp.maximum(1.0 - pt, 0.0) ** gamma * logpt
    return loss.mean() if size_average else loss.sum()


if __name__ == "__main__":
    key = jax.random.PRNGKey(0)
    k1, k2 = jax.random.split(key)

    # Case 1: NCHW module path, integer gamma, per-class alpha, mean reduction.
    N, C, H, W = 2, 4, 16, 16
    alpha1 = [0.25, 0.30, 0.25, 0.20]
    logits = jax.random.normal(k1, (N, C, H, W), dtype=jnp.float32)
    target = jax.random.randint(k2, (N, H, W), 0, C, dtype=jnp.int32)
    out = jax.block_until_ready(
        focal_loss(logits, target, gamma=2.0, alpha=alpha1, size_average=True))
    ref = focal_loss_ref(logits, target, 2.0, alpha1, True)
    assert jnp.allclose(out, ref, rtol=1e-4, atol=1e-5), (out, ref)

    # Case 2: fractional gamma, scalar (binary) alpha, sum reduction, forced
    # tiny blocks so the multi-block HW grid + ragged-tail mask path is hit.
    N2, C2, H2, W2 = 1, 2, 13, 21            # HW = 273 -> 128-lane blocks, ragged tail
    lg2 = jax.random.normal(k1, (N2, C2, H2, W2), dtype=jnp.float32)
    tg2 = jax.random.randint(k2, (N2, H2, W2), 0, C2, dtype=jnp.int32)
    out2 = jax.block_until_ready(
        focal_loss(lg2, tg2, gamma=1.5, alpha=0.25, size_average=False,
                   block_bytes=1))
    ref2 = focal_loss_ref(lg2, tg2, 1.5, 0.25, False)
    assert jnp.allclose(out2, ref2, rtol=1e-4, atol=1e-4), (out2, ref2)

    # Case 3: n=1 with larger HW -> grid split for megacore plus the in-kernel
    # sub-chunk loop (n_sub > 1); gamma=0, no alpha, mean reduction.
    N3, C3, H3, W3 = 1, 4, 32, 64            # HW = 2048
    lg3 = jax.random.normal(k1, (N3, C3, H3, W3), dtype=jnp.float32)
    tg3 = jax.random.randint(k2, (N3, H3, W3), 0, C3, dtype=jnp.int32)
    out3 = jax.block_until_ready(focal_loss(lg3, tg3, gamma=0.0, alpha=None))
    ref3 = focal_loss_ref(lg3, tg3, 0.0, None, True)
    assert jnp.allclose(out3, ref3, rtol=1e-4, atol=1e-5), (out3, ref3)

    # Case 4: tiny images batched several-samples-per-block, int8 targets kept
    # narrow end-to-end, C=3 per-class alpha, integer gamma.
    N4, C4, H4, W4 = 4, 3, 7, 9              # HW = 63 (non-128-multiple lanes)
    alpha4 = [0.2, 0.3, 0.5]
    lg4 = jax.random.normal(k1, (N4, C4, H4, W4), dtype=jnp.float32)
    tg4 = jax.random.randint(k2, (N4, H4, W4), 0, C4,
                             dtype=jnp.int32).astype(jnp.int8)
    out4 = jax.block_until_ready(
        focal_loss(lg4, tg4, gamma=2.0, alpha=alpha4, size_average=True))
    ref4 = focal_loss_ref(lg4, tg4, 2.0, alpha4, True)
    assert jnp.allclose(out4, ref4, rtol=1e-4, atol=1e-5), (out4, ref4)

    # Case 5: multi-sample blocks AND multi-chunk samples (rolled inner loop,
    # dynamic sample index + dynamic lane slice), non-integer gamma.
    N5, C5, H5, W5 = 10, 4, 32, 32           # HW = 1024
    lg5 = jax.random.normal(k1, (N5, C5, H5, W5), dtype=jnp.float32)
    tg5 = jax.random.randint(k2, (N5, H5, W5), 0, C5, dtype=jnp.int32)
    out5 = jax.block_until_ready(
        focal_loss(lg5, tg5, gamma=2.5, alpha=None, size_average=True))
    ref5 = focal_loss_ref(lg5, tg5, 2.5, None, True)
    assert jnp.allclose(out5, ref5, rtol=1e-4, atol=1e-5), (out5, ref5)

    print("KERNEL_OK")
</pallas_src>

<mosaic_0001>
module attributes {stable_mosaic.version = 11 : i64} {
  func.func @_focal_loss_kernel(%arg0: i32, %arg1: i32, %arg2: memref<1x4x256xf32, #tpu.memory_space<vmem>>, %arg3: memref<1x1x256xi32, #tpu.memory_space<vmem>>, %arg4: memref<1x1x1x256xf32, #tpu.memory_space<vmem>>) attributes {dimension_semantics = [#tpu.dimension_semantics<parallel>, #tpu.dimension_semantics<parallel>], iteration_bounds = array<i64: 2, 1>, scalar_prefetch = 0 : i64, scratch_operands = 0 : i64, tpu.core_type = #tpu.core_type<tc>, window_params = [{transform_indices = @transform_0, window_bounds = array<i64: 1, 4, 256>}, {transform_indices = @transform_1, window_bounds = array<i64: 1, 1, 256>}, {transform_indices = @transform_2, window_bounds = array<i64: 1, 1, 1, 256>}]} {
    %cst = arith.constant 0.000000e+00 : f32
    %0 = vector.broadcast %cst : f32 to vector<1x256xf32>
    %c0 = arith.constant 0 : index
    %c0_0 = arith.constant 0 : index
    %c0_1 = arith.constant 0 : index
    %1 = vector.load %arg2[%c0, %c0_0, %c0_1] : memref<1x4x256xf32, #tpu.memory_space<vmem>>, vector<1x4x256xf32>
    %2 = vector.shape_cast %1 : vector<1x4x256xf32> to vector<4x256xf32>
    %c0_2 = arith.constant 0 : index
    %c0_3 = arith.constant 0 : index
    %c0_4 = arith.constant 0 : index
    %3 = vector.load %arg3[%c0_2, %c0_3, %c0_4] : memref<1x1x256xi32, #tpu.memory_space<vmem>>, vector<1x1x256xi32>
    %4 = vector.shape_cast %3 : vector<1x1x256xi32> to vector<1x256xi32>
    %cst_5 = arith.constant dense<0xFF800000> : vector<256xf32>
    %5 = vector.multi_reduction <maximumf>, %2, %cst_5 [0] : vector<4x256xf32> to vector<256xf32>
    %6 = vector.shape_cast %5 : vector<256xf32> to vector<1x256xf32>
    %7 = vector.broadcast %6 : vector<1x256xf32> to vector<4x256xf32>
    %8 = arith.subf %2, %7 : vector<4x256xf32>
    %9 = math.exp %8 : vector<4x256xf32>
    %cst_6 = arith.constant dense<0.000000e+00> : vector<256xf32>
    %10 = vector.multi_reduction <add>, %9, %cst_6 [0] : vector<4x256xf32> to vector<256xf32>
    %11 = vector.shape_cast %10 : vector<256xf32> to vector<1x256xf32>
    %12 = tpu.iota {dimensions = array<i32: 0>} : vector<4x256xi32>
    %13 = vector.broadcast %4 : vector<1x256xi32> to vector<4x256xi32>
    %14 = arith.cmpi eq, %12, %13 : vector<4x256xi32>
    %cst_7 = arith.constant 0.000000e+00 : f32
    %15 = vector.broadcast %cst_7 : f32 to vector<4x256xf32>
    %16 = arith.select %14, %8, %15 : vector<4x256xi1>, vector<4x256xf32>
    %cst_8 = arith.constant dense<0.000000e+00> : vector<256xf32>
    %17 = vector.multi_reduction <add>, %16, %cst_8 [0] : vector<4x256xf32> to vector<256xf32>
    %18 = vector.shape_cast %17 : vector<256xf32> to vector<1x256xf32>
    %cst_9 = arith.constant 0.000000e+00 : f32
    %19 = vector.broadcast %cst_9 : f32 to vector<4x256xf32>
    %20 = arith.select %14, %9, %19 : vector<4x256xi1>, vector<4x256xf32>
    %cst_10 = arith.constant dense<0.000000e+00> : vector<256xf32>
    %21 = vector.multi_reduction <add>, %20, %cst_10 [0] : vector<4x256xf32> to vector<256xf32>
    %22 = vector.shape_cast %21 : vector<256xf32> to vector<1x256xf32>
    %23 = math.log %11 : vector<1x256xf32>
    %24 = arith.subf %18, %23 : vector<1x256xf32>
    %25 = tpu.reciprocal %11 {approx = true} : vector<1x256xf32> -> vector<1x256xf32>
    %26 = arith.mulf %11, %25 : vector<1x256xf32>
    %cst_11 = arith.constant 2.000000e+00 : f32
    %27 = vector.broadcast %cst_11 : f32 to vector<1x256xf32>
    %28 = arith.subf %27, %26 : vector<1x256xf32>
    %29 = arith.mulf %25, %28 : vector<1x256xf32>
    %30 = arith.mulf %11, %29 : vector<1x256xf32>
    %cst_12 = arith.constant 2.000000e+00 : f32
    %31 = vector.broadcast %cst_12 : f32 to vector<1x256xf32>
    %32 = arith.subf %31, %30 : vector<1x256xf32>
    %33 = arith.mulf %29, %32 : vector<1x256xf32>
    %34 = arith.mulf %22, %33 : vector<1x256xf32>
    %cst_13 = arith.constant 0.000000e+00 : f32
    %35 = vector.broadcast %cst_13 : f32 to vector<1x256xf32>
    %c0_i32 = arith.constant 0 : i32
    %36 = vector.broadcast %c0_i32 : i32 to vector<1x256xi32>
    %37 = arith.cmpi eq, %4, %36 : vector<1x256xi32>
    %cst_14 = arith.constant 2.500000e-01 : f32
    %38 = vector.broadcast %cst_14 : f32 to vector<1x256xf32>
    %39 = arith.select %37, %38, %35 : vector<1x256xi1>, vector<1x256xf32>
    %c1_i32 = arith.constant 1 : i32
    %40 = vector.broadcast %c1_i32 : i32 to vector<1x256xi32>
    %41 = arith.cmpi eq, %4, %40 : vector<1x256xi32>
    %cst_15 = arith.constant 3.000000e-01 : f32
    %42 = vector.broadcast %cst_15 : f32 to vector<1x256xf32>
    %43 = arith.select %41, %42, %39 : vector<1x256xi1>, vector<1x256xf32>
    %c2_i32 = arith.constant 2 : i32
    %44 = vector.broadcast %c2_i32 : i32 to vector<1x256xi32>
    %45 = arith.cmpi eq, %4, %44 : vector<1x256xi32>
    %cst_16 = arith.constant 2.500000e-01 : f32
    %46 = vector.broadcast %cst_16 : f32 to vector<1x256xf32>
    %47 = arith.select %45, %46, %43 : vector<1x256xi1>, vector<1x256xf32>
    %c3_i32 = arith.constant 3 : i32
    %48 = vector.broadcast %c3_i32 : i32 to vector<1x256xi32>
    %49 = arith.cmpi eq, %4, %48 : vector<1x256xi32>
    %cst_17 = arith.constant 2.000000e-01 : f32
    %50 = vector.broadcast %cst_17 : f32 to vector<1x256xf32>
    %51 = arith.select %49, %50, %47 : vector<1x256xi1>, vector<1x256xf32>
    %52 = arith.mulf %24, %51 : vector<1x256xf32>
    %cst_18 = arith.constant 1.000000e+00 : f32
    %53 = vector.broadcast %cst_18 : f32 to vector<1x256xf32>
    %54 = arith.subf %53, %34 : vector<1x256xf32>
    %cst_19 = arith.constant 0.000000e+00 : f32
    %55 = vector.broadcast %cst_19 : f32 to vector<1x256xf32>
    %56 = arith.maximumf %54, %55 : vector<1x256xf32>
    %57 = arith.mulf %56, %56 : vector<1x256xf32>
    %58 = arith.mulf %57, %52 : vector<1x256xf32>
    %cst_20 = arith.constant 0.000000e+00 : f32
    %59 = vector.broadcast %cst_20 : f32 to vector<1x256xf32>
    %60 = arith.subf %59, %58 : vector<1x256xf32>
    %61 = arith.addf %0, %60 : vector<1x256xf32>
    %62 = vector.shape_cast %61 : vector<1x256xf32> to vector<1x1x1x256xf32>
    %c0_21 = arith.constant 0 : index
    %c0_22 = arith.constant 0 : index
    %c0_23 = arith.constant 0 : index
    %c0_24 = arith.constant 0 : index
    %63 = vector.load %arg4[%c0_21, %c0_22, %c0_23, %c0_24] : memref<1x1x1x256xf32, #tpu.memory_space<vmem>>, vector<1x1x1x256xf32>
    tpu.vector_store %arg4[%c0_21, %c0_22, %c0_23, %c0_24], %62 {strides = array<i32>} : memref<1x1x1x256xf32, #tpu.memory_space<vmem>>, vector<1x1x1x256xf32>,
    return
  }
  func.func @transform_0(%arg0: i32, %arg1: i32) -> (i32, i32, i32) {
    %c0_i32 = arith.constant 0 : i32
    %c0_i32_0 = arith.constant 0 : i32
    return %arg0, %c0_i32, %arg1 : i32, i32, i32
  }
  func.func @transform_1(%arg0: i32, %arg1: i32) -> (i32, i32, i32) {
    %c0_i32 = arith.constant 0 : i32
    %c0_i32_0 = arith.constant 0 : i32
    return %arg0, %c0_i32, %arg1 : i32, i32, i32
  }
  func.func @transform_2(%arg0: i32, %arg1: i32) -> (i32, i32, i32, i32) {
    %c0_i32 = arith.constant 0 : i32
    %c0_i32_0 = arith.constant 0 : i32
    %c0_i32_1 = arith.constant 0 : i32
    return %arg0, %arg1, %c0_i32, %c0_i32_0 : i32, i32, i32, i32
  }
}

</mosaic_0001>

<llo_original>
// kernel: tpu_custom_call.1
$region0: #{tpu_custom_call.1}
  #allocation0 [shape = 'u32[]', space=smem, size = 0x4, offset = 0x4, fixed_abs, tag = 'smem constant byte address 0x4 - core index']
  #allocation1 [shape = 'u32[144,128]{1,0:T(1,128)}', space=vmem, size = 0x12000, scoped, tag = 'internal scratch']
  %s0 = inlined_call_operand.hbm [shape: f32[2,4,256], index: 0, kind: input, shape index: {}]
  %s1 = inlined_call_operand.hbm [shape: s32[2,1,256], index: 1, kind: input, shape index: {}]
  %s2 = inlined_call_operand.hbm [shape: f32[2,1,1,256], index: 2, kind: output, shape index: {}]
  %s3 = sld [smem:[#allocation0]]
  $region49: #{tpu_custom_call.1} parent=0
    _
  %s5 = ssub.s32 1, %s3
  %s6 = scalar_select 0, %s5, %s3
  $region1: #{tpu_custom_call.1} parent=0
    #allocation2 [shape = 'u8[8192]{0}', space=vmem, size = 0x2000, scoped, tag = 'input window, operand 0']
    #allocation3 [shape = 's32[2]{0}', space=sflag, size = 0x8, scoped, tag = 'scoped memory for tpu_custom_call.1']
    #allocation4 [shape = 's32[2]{0}', space=sflag, size = 0x8, scoped, tag = 'scoped memory for tpu_custom_call.1']
    #allocation5 [shape = 'u8[2048]{0}', space=vmem, size = 0x800, scoped, tag = 'input window, operand 1']
    #allocation6 [shape = 's32[2]{0}', space=sflag, size = 0x8, scoped, tag = 'scoped memory for tpu_custom_call.1']
    #allocation7 [shape = 'u8[2048]{0}', space=vmem, size = 0x800, scoped, tag = 'output window, operand 0']
    %7 = vsyncpa [#allocation3], 0
    %s8 = scalar_lea.sflag [#allocation3], 1
    %9 = vsyncpa %s8, 0
    %10 = vsyncpa [#allocation6], 0
    %s11 = scalar_lea.sflag [#allocation6], 1
    %12 = vsyncpa %s11, 0
    %13 = vsyncpa [#allocation4], 0
    %s14 = scalar_lea.sflag [#allocation4], 1
    %15 = vsyncpa %s14, 0
    loop: start=0, step=1, limit=4
    $region2: #{tpu_custom_call.1} parent=1 // loop_pre_header
      _
    $region3: #{tpu_custom_call.1} parent=1 // loop_header
      %s17 = sphi 0, %s21
      %p18 = scmp.ge.s32.totalorder %s17, 4
      %s24 = sphi 0, %s36
      %s25 = sphi 0, %s32
      %s26 = sphi 0, %s24
      %s27 = sphi 0, %s25
      %s28 = sphi 0, %s26
      %s29 = sphi 0, %s27
      %s41 = sphi 0, %s43
      %s44 = sphi 0, %s41
      %s45 = sphi 0, %s44
      %s61 = sphi 0, %s45
      %s69 = sphi 0, %s71
      %s72 = sphi 0, %s69
      %s73 = sphi 0, %s72
      %s89 = sphi 0, %s73
      %s97 = sphi 0, %s99
      %s100 = sphi 0, %s97
      %s101 = sphi 0, %s100
      %s117 = sphi 0, %s101
    $region4: #{tpu_custom_call.1} parent=1 // loop_header_branch
      %20 = sbr.rel (%p18) target = $region8
    $region5: #{tpu_custom_call.1} parent=1 // loop_body
      %s22 = ssub.s32 %s17, 1
      %s23 = ssub.s32 %s17, 2
      %s30 = sadd.s32 1, %s25
      %p31 = scmp.ge.s32.totalorder %s30, 1
      %s32 = scalar_select %p31, 0, %s30
      %s33 = sadd.s32 1, %s24
      %s34 = scalar_select %p31, %s33, %s24
      %p35 = scmp.ge.s32.totalorder %s34, 2
      %s36 = scalar_select %p35, 0, %s34
      %s37 = ssub.s32 %s24, %s36
      %s38 = ssub.s32 %s25, %s32
      %s39 = sor.u32 %s37, %s38
      %p40 = scmp.eq.s32.totalorder %s39, 0
      %s42 = sadd.s32 %s41, 1
      %s43 = scalar_select %p40, %s41, %s42
      %p46 = pneg %p40
      %p47 = scmp.eq.s32.totalorder %s17, 1
      %p48 = por %p46, %p47
      %p49 = scmp.ne.s32.totalorder %s41, %s44
      %p50 = scmp.eq.s32.totalorder %s17, 0
      %p51 = por %p49, %p50
      %p52 = scmp.ne.s32.totalorder %s41, %s44
      %p53 = scmp.eq.s32.totalorder %s22, 1
      %p54 = por %p52, %p53
      %p55 = scmp.ne.s32.totalorder %s44, %s45
      %p56 = scmp.eq.s32.totalorder %s22, 0
      %p57 = por %p55, %p56
      %p58 = scmp.ne.s32.totalorder %s44, %s45
      %p59 = scmp.eq.s32.totalorder %s23, 1
      %p60 = por %p58, %p59
      %p62 = scmp.ne.s32.totalorder %s45, %s61
      %p63 = scmp.eq.s32.totalorder %s23, 0
      %p64 = por %p62, %p63
      %s65 = ssub.s32 %s24, %s36
      %s66 = ssub.s32 %s25, %s32
      %s67 = sor.u32 %s65, %s66
      %p68 = scmp.eq.s32.totalorder %s67, 0
      %s70 = sadd.s32 %s69, 1
      %s71 = scalar_select %p68, %s69, %s70
      %p74 = pneg %p68
      %p75 = scmp.eq.s32.totalorder %s17, 1
      %p76 = por %p74, %p75
      %p77 = scmp.ne.s32.totalorder %s69, %s72
      %p78 = scmp.eq.s32.totalorder %s17, 0
      %p79 = por %p77, %p78
      %p80 = scmp.ne.s32.totalorder %s69, %s72
      %p81 = scmp.eq.s32.totalorder %s22, 1
      %p82 = por %p80, %p81
      %p83 = scmp.ne.s32.totalorder %s72, %s73
      %p84 = scmp.eq.s32.totalorder %s22, 0
      %p85 = por %p83, %p84
      %p86 = scmp.ne.s32.totalorder %s72, %s73
      %p87 = scmp.eq.s32.totalorder %s23, 1
      %p88 = por %p86, %p87
      %p90 = scmp.ne.s32.totalorder %s73, %s89
      %p91 = scmp.eq.s32.totalorder %s23, 0
      %p92 = por %p90, %p91
      %s93 = ssub.s32 %s24, %s36
      %s94 = ssub.s32 %s25, %s32
      %s95 = sor.u32 %s93, %s94
      %p96 = scmp.eq.s32.totalorder %s95, 0
      %s98 = sadd.s32 %s97, 1
      %s99 = scalar_select %p96, %s97, %s98
      %p102 = pneg %p96
      %p103 = scmp.eq.s32.totalorder %s17, 1
      %p104 = por %p102, %p103
      %p105 = scmp.ne.s32.totalorder %s97, %s100
      %p106 = scmp.eq.s32.totalorder %s17, 0
      %p107 = por %p105, %p106
      %p108 = scmp.ne.s32.totalorder %s97, %s100
      %p109 = scmp.eq.s32.totalorder %s22, 1
      %p110 = por %p108, %p109
      %p111 = scmp.ne.s32.totalorder %s100, %s101
      %p112 = scmp.eq.s32.totalorder %s22, 0
      %p113 = por %p111, %p112
      %p114 = scmp.ne.s32.totalorder %s100, %s101
      %p115 = scmp.eq.s32.totalorder %s23, 1
      %p116 = por %p114, %p115
      %p118 = scmp.ne.s32.totalorder %s101, %s117
      %p119 = scmp.eq.s32.totalorder %s23, 0
      %p120 = por %p118, %p119
      %p121 = scmp.le.s32.totalorder 1, %s17
      %p122 = scmp.lt.s32.totalorder %s17, 3
      %p123 = pnand %p121, %p122
      %p124 = pneg %p123
      // Predicated region
      $region9: #{tpu_custom_call.1} parent=5 // pred_check
        _
      $region10: #{tpu_custom_call.1} parent=5 // pred_check_branch
        %126 = sbr.rel (%p123) target = $region12
      $region11: #{tpu_custom_call.1} parent=5 // pred_region
        %s127 = ssub.s32 %s17, 1
      $region12: #{tpu_custom_call.1} parent=5 // pred_fallthru
        _
      %p128 = scmp.lt.s32.totalorder %s17, 2
      // Predicated region
      $region13: #{tpu_custom_call.1} parent=5 // pred_check
        %p129 = pneg %p128
      $region14: #{tpu_custom_call.1} parent=5 // pred_check_branch
        %131 = sbr.rel (%p129) target = $region16
      $region15: #{tpu_custom_call.1} parent=5 // pred_region
        // Predicated region
        $region17: #{tpu_custom_call.1} parent=15 // pred_check
          %p132 = pneg %p51
        $region18: #{tpu_custom_call.1} parent=15 // pred_check_branch
          %134 = sbr.rel (%p132) target = $region20
        $region19: #{tpu_custom_call.1} parent=15 // pred_region
          %s135 = sand.u32 %s41, 1
          %s136 = scalar_lea.sflag [#allocation3], %s135
          %s137 = sand.u32 %s41, 1
          %s138 = smul.addr %s137, 8
          %s139 = scalar_lea.vmem [#allocation2], %s138
          %s140 = smul.u32 2, %s25
          %s142 = ssub.s32 128, 128
          %143 = vsyncadd %s136, %s142
          %s144 = smul.addr %s24, 2
          %s145 = sadd.s32 %s140, %s144
          %s146 = smul.addr %s145, 64
          %s147 = scalar_lea.hbm %s0, %s146
          %s149 = sshll.u32 %s139, 4
          %s150 = int_to_ptr.vmem [resolvable:$true] %s149
          %152 = dma.hbm_to_vmem [thread:$0]  %s147, 128, %s150, %s136
        $region20: #{tpu_custom_call.1} parent=15 // pred_fallthru
          _
        // Predicated region
        $region21: #{tpu_custom_call.1} parent=15 // pred_check
          %p153 = pneg %p79
        $region22: #{tpu_custom_call.1} parent=15 // pred_check_branch
          %155 = sbr.rel (%p153) target = $region24
        $region23: #{tpu_custom_call.1} parent=15 // pred_region
          %s156 = sand.u32 %s69, 1
          %s157 = scalar_lea.sflag [#allocation6], %s156
          %s158 = sand.u32 %s69, 1
          %s159 = smul.addr %s158, 2
          %s160 = scalar_lea.vmem [#allocation5], %s159
          %s161 = smul.u32 2, %s25
          %s163 = ssub.s32 32, 32
          %164 = vsyncadd %s157, %s163
          %s165 = smul.addr %s24, 2
          %s166 = sadd.s32 %s161, %s165
          %s167 = smul.addr %s166, 16
          %s168 = scalar_lea.hbm %s1, %s167
          %s170 = sshll.u32 %s160, 4
          %s171 = int_to_ptr.vmem [resolvable:$true] %s170
          %173 = dma.hbm_to_vmem [thread:$0]  %s168, 32, %s171, %s157
        $region24: #{tpu_custom_call.1} parent=15 // pred_fallthru
          _
      $region16: #{tpu_custom_call.1} parent=5 // pred_fallthru
        _
      %p174 = scmp.le.s32.totalorder 1, %s17
      %p175 = scmp.lt.s32.totalorder %s17, 3
      %p176 = pnand %p174, %p175
      %p177 = pneg %p176
      // Predicated region
      $region25: #{tpu_custom_call.1} parent=5 // pred_check
        _
      $region26: #{tpu_custom_call.1} parent=5 // pred_check_branch
        %179 = sbr.rel (%p176) target = $region28
      $region27: #{tpu_custom_call.1} parent=5 // pred_region
        %s180 = ssub.s32 %s17, 1
        %s181 = sand.u32 %s44, 1
        %s182 = scalar_lea.sflag [#allocation3], %s181
        %s183 = sand.u32 %s44, 1
        %s184 = smul.addr %s183, 8
        %s185 = scalar_lea.vmem [#allocation2], %s184
        // Predicated region
        $region29: #{tpu_custom_call.1} parent=27 // pred_check
          %p186 = pneg %p57
        $region30: #{tpu_custom_call.1} parent=27 // pred_check_branch
          %188 = sbr.rel (%p186) target = $region32
        $region31: #{tpu_custom_call.1} parent=27 // pred_region
          %189 = dma.done %s182, 128
        $region32: #{tpu_custom_call.1} parent=27 // pred_fallthru
          _
        %s190 = sand.u32 %s72, 1
        %s191 = scalar_lea.sflag [#allocation6], %s190
        %s192 = sand.u32 %s72, 1
        %s193 = smul.addr %s192, 2
        %s194 = scalar_lea.vmem [#allocation5], %s193
        // Predicated region
        $region33: #{tpu_custom_call.1} parent=27 // pred_check
          %p195 = pneg %p85
        $region34: #{tpu_custom_call.1} parent=27 // pred_check_branch
          %197 = sbr.rel (%p195) target = $region36
        $region35: #{tpu_custom_call.1} parent=27 // pred_region
          %198 = dma.done %s191, 32
        $region36: #{tpu_custom_call.1} parent=27 // pred_fallthru
          _
        %s199 = sand.u32 %s44, 1
        %s200 = scalar_lea.sflag [#allocation3], %s199
        %s201 = sand.u32 %s44, 1
        %s202 = smul.addr %s201, 8
        %s203 = scalar_lea.vmem [#allocation2], %s202
        %p204 = pneg %p57
        %p205 = pneg %p54
        %s206 = sand.u32 %s72, 1
        %s207 = scalar_lea.sflag [#allocation6], %s206
        %s208 = sand.u32 %s72, 1
        %s209 = smul.addr %s208, 2
        %s210 = scalar_lea.vmem [#allocation5], %s209
        %p211 = pneg %p85
        %p212 = pneg %p82
        %p213 = pneg %p113
        %p214 = pneg %p110
        %s215 = sand.u32 %s100, 1
        %s216 = scalar_lea.sflag [#allocation4], %s215
        %s217 = sand.u32 %s100, 1
        %s218 = smul.addr %s217, 2
        %s219 = scalar_lea.vmem [#allocation7], %s218
        %s220 = smul.u32 2, %s27
        %s221 = smul.u32 2, %s27
        %v222 = vld [vmem:[%s185] sm:$0xff]
        %v223 = vld [vmem:[%s194] sm:$0x3]
        %v225 = vcombine.high %v222, %v222
        %vm227 = vcmask 1043456
        %v228 = vsel %vm227, %v222, -inf
        %v229 = vrot.slane %v228, 4
        %v230 = vmax.f32 %v228, %v229
        %v231 = vrot.slane %v230, 2
        %v232 = vmax.f32 %v230, %v231
        %v233 = vrot.slane %v232, 1
        %v234 = vmax.f32 %v232, %v233
        %v235 = vsel %vm227, %v225, -inf
        %v236 = vrot.slane %v235, 4
        %v237 = vmax.f32 %v235, %v236
        %v238 = vrot.slane %v237, 2
        %v239 = vmax.f32 %v237, %v238
        %v240 = vrot.slane %v239, 1
        %v241 = vmax.f32 %v239, %v240
        %v244 = vcombine.low %v234, %v241
        %v246 = vsub.f32 %v222, %v244
        %v247 = vmul.f32 %v246, 1.442695
        %v248 = vpow.pop %v247
        %v250 = vcombine.high %v248, %v248
        %v252 = vsel %vm227, %v248, 0.0
        %v253 = vrot.slane %v252, 4
        %v254 = vadd.f32 %v252, %v253
        %v255 = vrot.slane %v254, 2
        %v256 = vadd.f32 %v254, %v255
        %v257 = vrot.slane %v256, 1
        %v258 = vadd.f32 %v256, %v257
        %v259 = vsel %vm227, %v250, 0.0
        %v260 = vrot.slane %v259, 4
        %v261 = vadd.f32 %v259, %v260
        %v262 = vrot.slane %v261, 2
        %v263 = vadd.f32 %v261, %v262
        %v264 = vrot.slane %v263, 1
        %v265 = vadd.f32 %v263, %v264
        %v266 = vlaneseq
        %v267 = vshrl.u32 %v266, 7
        %v268 = vlaneseq
        %v269 = vshrl.u32 %v268, 7
        %v270 = vsub.s32 0, %v269
        %v271 = vrot.slane %v223, %v270
        %v272 = vlaneseq
        %v273 = vshrl.u32 %v272, 7
        %v274 = vsub.s32 1, %v273
        %v275 = vrot.slane %v223, %v274
        %vm276 = vcmp.eq.s32.totalorder %v267, %v271
        %vm277 = vcmp.eq.s32.totalorder %v267, %v275
        %v279 = vcombine.high %v246, %v246
        %v281 = vsel %vm276, %v246, 0.0
        %v282 = vsel %vm277, %v279, 0.0
        %v283 = vsel %vm227, %v281, 0.0
        %v284 = vrot.slane %v283, 4
        %v285 = vadd.f32 %v283, %v284
        %v286 = vrot.slane %v285, 2
        %v287 = vadd.f32 %v285, %v286
        %v288 = vrot.slane %v287, 1
        %v289 = vadd.f32 %v287, %v288
        %v290 = vsel %vm227, %v282, 0.0
        %v291 = vrot.slane %v290, 4
        %v292 = vadd.f32 %v290, %v291
        %v293 = vrot.slane %v292, 2
        %v294 = vadd.f32 %v292, %v293
        %v295 = vrot.slane %v294, 1
        %v296 = vadd.f32 %v294, %v295
        %v297 = vsel %vm276, %v248, 0.0
        %v298 = vsel %vm277, %v250, 0.0
        %v299 = vsel %vm227, %v297, 0.0
        %v300 = vrot.slane %v299, 4
        %v301 = vadd.f32 %v299, %v300
        %v302 = vrot.slane %v301, 2
        %v303 = vadd.f32 %v301, %v302
        %v304 = vrot.slane %v303, 1
        %v305 = vadd.f32 %v303, %v304
        %v306 = vsel %vm227, %v298, 0.0
        %v307 = vrot.slane %v306, 4
        %v308 = vadd.f32 %v306, %v307
        %v309 = vrot.slane %v308, 2
        %v310 = vadd.f32 %v308, %v309
        %v311 = vrot.slane %v310, 1
        %v312 = vadd.f32 %v310, %v311
        %v313 = vlog2.pop %v258
        %v314 = vmul.f32 %v313, 0.6931472
        %v315 = vlog2.pop %v265
        %v316 = vmul.f32 %v315, 0.6931472
        %v317 = vsub.f32 %v289, %v314
        %v318 = vsub.f32 %v296, %v316
        %v319 = vrcp.pop %v258
        %v320 = vrcp.pop %v265
        %v321 = vmul.f32 %v258, %v319
        %v322 = vmul.f32 %v265, %v320
        %v323 = vsub.f32 2.0, %v321
        %v324 = vsub.f32 2.0, %v322
        %v325 = vmul.f32 %v319, %v323
        %v326 = vmul.f32 %v320, %v324
        %v327 = vmul.f32 %v258, %v325
        %v328 = vmul.f32 %v265, %v326
        %v329 = vsub.f32 2.0, %v327
        %v330 = vsub.f32 2.0, %v328
        %v331 = vmul.f32 %v325, %v329
        %v332 = vmul.f32 %v326, %v330
        %v333 = vmul.f32 %v305, %v331
        %v334 = vmul.f32 %v312, %v332
        %vm335 = vcmp.eq.s32.totalorder %v223, 0
        %v336 = vsel %vm335, 0.25, 0.0
        %vm337 = vcmp.eq.s32.totalorder %v223, 1
        %v338 = vsel %vm337, 0.3, %v336
        %vm339 = vcmp.eq.s32.totalorder %v223, 2
        %v340 = vsel %vm339, 0.25, %v338
        %vm341 = vcmp.eq.s32.totalorder %v223, 3
        %v342 = vsel %vm341, 0.2, %v340
        %v344 = vlaneseq
        %v345 = vshrl.u32 %v344, 7
        %v346 = vsub.s32 0, %v345
        %v347 = vrot.slane %v342, %v346
        %v348 = vlaneseq
        %v349 = vshrl.u32 %v348, 7
        %v350 = vsub.s32 1, %v349
        %v351 = vrot.slane %v342, %v350
        %v354 = vmul.f32 %v317, %v347
        %v355 = vmul.f32 %v318, %v351
        %v356 = vsub.f32 1.0, %v333
        %v357 = vsub.f32 1.0, %v334
        %v358 = vmax.f32 %v356, 0.0
        %v359 = vmax.f32 %v357, 0.0
        %v360 = vmul.f32 %v358, %v358
        %v361 = vmul.f32 %v359, %v359
        %v362 = vmul.f32 %v360, %v354
        %v363 = vmul.f32 %v361, %v355
        %v364 = vsub.f32 0.0, %v362
        %v365 = vsub.f32 0.0, %v363
        %v366 = vadd.f32 %v364, 0.0
        %v367 = vadd.f32 %v365, 0.0
        %v370 = vcombine.low %v366, %v367
        %v372 = vunpack.c.l.s4 1966171168
        %v373 = vunpack.c.0.s8 %v372
        %v374 = vlaneseq
        %v375 = vshrl.u32 %v374, 7
        %v376 = vsub.s32 %v373, %v375
        %v377 = vrot.slane %v370, %v376
        %v379 = vunpack.c.l.s4 1966171168
        %v380 = vunpack.c.0.s8 %v379
        %v381 = vlaneseq
        %v382 = vshrl.u32 %v381, 7
        %v383 = vsub.s32 %v380, %v382
        %v384 = vrot.slane %v377, %v383
        %v386 = vlaneseq
        %vm387 = vcmp.ge.s32.totalorder %v386, 0
        %vm388 = vcmp.lt.s32.totalorder %v386, 256
        %vm389 = vmand %vm387, %vm388
        %390 = vst.msk [vmem:[%s219] sm:$0x3] %vm389, %v384
        %s391 = sand.u32 %s100, 1
        %s392 = scalar_lea.sflag [#allocation4], %s391
        %s393 = sand.u32 %s100, 1
        %s394 = smul.addr %s393, 2
        %s395 = scalar_lea.vmem [#allocation7], %s394
        // Predicated region
        $region37: #{tpu_custom_call.1} parent=27 // pred_check
          %p396 = pneg %p110
        $region38: #{tpu_custom_call.1} parent=27 // pred_check_branch
          %398 = sbr.rel (%p396) target = $region40
        $region39: #{tpu_custom_call.1} parent=27 // pred_region
          %s400 = ssub.s32 32, 32
          %401 = vsyncadd %s392, %s400
          %s402 = smul.addr %s27, 2
          %s403 = smul.addr %s26, 2
          %s404 = sadd.s32 %s402, %s403
          %s405 = smul.addr %s404, 16
          %s406 = scalar_lea.hbm %s2, %s405
          %s408 = sshll.u32 %s395, 4
          %s409 = int_to_ptr.vmem [resolvable:$true] %s408
          %411 = dma.vmem_to_hbm [thread:$0]  %s409, 32, %s406, %s392
        $region40: #{tpu_custom_call.1} parent=27 // pred_fallthru
          _
      $region28: #{tpu_custom_call.1} parent=5 // pred_fallthru
        _
      %p412 = scmp.le.s32.totalorder 2, %s17
      // Predicated region
      $region41: #{tpu_custom_call.1} parent=5 // pred_check
        %p413 = pneg %p412
      $region42: #{tpu_custom_call.1} parent=5 // pred_check_branch
        %415 = sbr.rel (%p413) target = $region44
      $region43: #{tpu_custom_call.1} parent=5 // pred_region
        %s416 = ssub.s32 %s17, 2
        // Predicated region
        $region45: #{tpu_custom_call.1} parent=43 // pred_check
          %p417 = pneg %p116
        $region46: #{tpu_custom_call.1} parent=43 // pred_check_branch
          %419 = sbr.rel (%p417) target = $region48
        $region47: #{tpu_custom_call.1} parent=43 // pred_region
          %s420 = sand.u32 %s101, 1
          %s421 = scalar_lea.sflag [#allocation4], %s420
          %s422 = sand.u32 %s101, 1
          %s423 = smul.addr %s422, 2
          %s424 = scalar_lea.vmem [#allocation7], %s423
          %425 = dma.done %s421, 32
        $region48: #{tpu_custom_call.1} parent=43 // pred_fallthru
          _
      $region44: #{tpu_custom_call.1} parent=5 // pred_fallthru
        _
    $region6: #{tpu_custom_call.1} parent=1 // loop_footer
      %s21 = sadd.s32 1, %s17
    $region7: #{tpu_custom_call.1} parent=1 // loop_footer_branch
      %16 = sbr.rel target = $region3
    $region8: #{tpu_custom_call.1} parent=1 // loop_exit
      _
    %426 = vsyncpa [#allocation3], 1
    %s427 = scalar_lea.sflag [#allocation3], 1
    %428 = vsyncpa %s427, 1
    %429 = vsyncpa [#allocation6], 1
    %s430 = scalar_lea.sflag [#allocation6], 1
    %431 = vsyncpa %s430, 1
    %432 = vsyncpa [#allocation4], 1
    %s433 = scalar_lea.sflag [#allocation4], 1
    %434 = vsyncpa %s433, 1

</llo_original>
